<compile_context>
chip_gen: v6e
topology: v6e:2x2x1
jax: 0.10.0
libtpu: 0.0.40
codegen_flags: <defaults>
</compile_context>

<pallas_src>
import math

import jax
import jax.numpy as jnp
from jax.experimental import pallas as pl
from jax.experimental.pallas import tpu as pltpu

IN_FEATURES = 12 * 8 * 8   # 768
OUT_FEATURES = 1


def _linear_kernel(x_ref, w_ref, b_ref, o_ref):
    # x_ref: (TM, 768) compute dtype (VMEM)   w_ref: (768, 1) compute dtype (VMEM)
    # b_ref: (1, 1) f32 (SMEM scalar)         o_ref: (TM, 1) f32 (VMEM)
    acc = jnp.dot(x_ref[...], w_ref[...], preferred_element_type=jnp.float32)
    o_ref[...] = (acc + b_ref[0, 0]).astype(o_ref.dtype)


def simple_chess_net_forward(x_nchw, weight, bias, *,
                             block_rows=4096,
                             compute_dtype=jnp.bfloat16):
    """Forward pass matching SimpleChessNet.

    x_nchw : (N, 12, 8, 8) float32
    weight : (1, 768) float32   (PyTorch nn.Linear layout)
    bias   : (1,)     float32
    returns: (N, 1)   float32
    """
    n = x_nchw.shape[0]
    # nn.Flatten(): (N, 12, 8, 8) -> (N, 768), row-major — same as reshape.
    x_flat = x_nchw.reshape(n, IN_FEATURES).astype(compute_dtype)
    # Pre-transpose weight so the kernel does x @ W^T directly.
    w_t = weight.T.astype(compute_dtype)                  # (768, 1)
    b2 = bias.reshape(1, 1).astype(jnp.float32)           # (1, 1) scalar -> SMEM

    # Batch tile: multiple of 8 sublanes, capped by block_rows. Pad N up to a
    # multiple of the tile so every grid step writes a full block.
    n_ceil8 = ((n + 7) // 8) * 8
    tm = max(8, min((block_rows // 8) * 8, n_ceil8))
    n_padded = ((n + tm - 1) // tm) * tm
    if n_padded != n:
        x_flat = jnp.pad(x_flat, ((0, n_padded - n), (0, 0)))

    grid = (n_padded // tm,)
    elt = jnp.dtype(compute_dtype).itemsize
    cost = pl.CostEstimate(
        flops=2 * n_padded * IN_FEATURES * OUT_FEATURES,
        transcendentals=0,
        bytes_accessed=(n_padded * IN_FEATURES * elt          # activations
                        + IN_FEATURES * OUT_FEATURES * elt    # weight
                        + n_padded * OUT_FEATURES * 4         # output
                        + 4))                                 # bias

    out = pl.pallas_call(
        _linear_kernel,
        out_shape=jax.ShapeDtypeStruct((n_padded, OUT_FEATURES), jnp.float32),
        grid=grid,
        in_specs=[
            # x: one (tm, 768) tile per grid step — the only real HBM traffic,
            # auto double-buffered by the BlockSpec pipeline.
            pl.BlockSpec((tm, IN_FEATURES), lambda i: (i, 0)),
            # Weight: same block every step -> stays resident in VMEM.
            pl.BlockSpec((IN_FEATURES, OUT_FEATURES), lambda i: (0, 0)),
            # Bias: tiny scalar, keep it in SMEM (no per-step VMEM DMA).
            pl.BlockSpec(memory_space=pltpu.MemorySpace.SMEM),
        ],
        out_specs=pl.BlockSpec((tm, OUT_FEATURES), lambda i: (i, 0)),
        compiler_params=pltpu.CompilerParams(
            dimension_semantics=("parallel",),
            vmem_limit_bytes=32 * 1024 * 1024),
        cost_estimate=cost,
    )(x_flat, w_t, b2)

    return out[:n] if n_padded != n else out


def init_params(key):
    """Deterministic init mirroring nn.Linear default (uniform +/- 1/sqrt(fan_in))."""
    kw, kb = jax.random.split(key)
    bound = 1.0 / math.sqrt(IN_FEATURES)
    weight = jax.random.uniform(
        kw, (OUT_FEATURES, IN_FEATURES), jnp.float32, -bound, bound)
    bias = jax.random.uniform(
        kb, (OUT_FEATURES,), jnp.float32, -bound, bound)
    return weight, bias


if __name__ == "__main__":
    key = jax.random.PRNGKey(0)
    k_x, k_p, k_x2 = jax.random.split(key, 3)

    weight, bias = init_params(k_p)

    # Small batch of board tensors: (N, 12, 8, 8) — single tile, padded 2 -> 8 rows.
    x = jax.random.normal(k_x, (2, 12, 8, 8), dtype=jnp.float32)
    out = simple_chess_net_forward(x, weight, bias)
    jax.block_until_ready(out)
    ref = x.reshape(x.shape[0], -1) @ weight.T + bias
    assert out.shape == (2, 1)
    assert jnp.allclose(out, ref, atol=5e-2, rtol=5e-2)

    # Exercise the multi-tile grid + padding path (20 rows, 8-row tiles -> grid of 3).
    x2 = jax.random.normal(k_x2, (20, 12, 8, 8), dtype=jnp.float32)
    out2 = simple_chess_net_forward(x2, weight, bias, block_rows=8)
    jax.block_until_ready(out2)
    ref2 = x2.reshape(x2.shape[0], -1) @ weight.T + bias
    assert out2.shape == (20, 1)
    assert jnp.allclose(out2, ref2, atol=5e-2, rtol=5e-2)

    print("KERNEL_OK")
</pallas_src>

<mosaic_0001>
module attributes {stable_mosaic.version = 11 : i64} {
  func.func @_linear_kernel(%arg0: i32, %arg1: memref<8x768xbf16, #tpu.memory_space<vmem>>, %arg2: memref<768x1xbf16, #tpu.memory_space<vmem>>, %arg3: memref<1x1xf32, #tpu.memory_space<smem>>, %arg4: memref<8x1xf32, #tpu.memory_space<vmem>>) attributes {dimension_semantics = [#tpu.dimension_semantics<parallel>], iteration_bounds = array<i64: 1>, scalar_prefetch = 0 : i64, scratch_operands = 0 : i64, tpu.core_type = #tpu.core_type<tc>, window_params = [{transform_indices = @transform_0, window_bounds = array<i64: 8, 768>}, {pipeline_mode = #tpu.pipeline_mode<synchronous>, transform_indices = @transform_1, window_bounds = array<i64: 768, 1>}, {transform_indices = @transform_2, window_bounds = array<i64: 1, 1>}, {transform_indices = @transform_3, window_bounds = array<i64: 8, 1>}]} {
    %c0 = arith.constant 0 : index
    %c0_0 = arith.constant 0 : index
    %0 = vector.load %arg1[%c0, %c0_0] : memref<8x768xbf16, #tpu.memory_space<vmem>>, vector<8x768xbf16>
    %c0_1 = arith.constant 0 : index
    %c0_2 = arith.constant 0 : index
    %1 = vector.load %arg2[%c0_1, %c0_2] : memref<768x1xbf16, #tpu.memory_space<vmem>>, vector<768x1xbf16>
    %cst = arith.constant dense<0.000000e+00> : vector<8x1xf32>
    %2 = tpu.matmul %0, %1, %cst {dimension_numbers = #tpu.dot_dimension_numbers<[1], [0], [0], [1], [0, 0, 1, 1], [], []>} : vector<8x768xbf16>, vector<768x1xbf16>, vector<8x1xf32> -> vector<8x1xf32>
    %c0_3 = arith.constant 0 : index
    %c0_4 = arith.constant 0 : index
    %3 = memref.load %arg3[%c0_3, %c0_4] : memref<1x1xf32, #tpu.memory_space<smem>>
    %4 = vector.broadcast %3 : f32 to vector<8x1xf32>
    %5 = arith.addf %2, %4 : vector<8x1xf32>
    %c0_5 = arith.constant 0 : index
    %c0_6 = arith.constant 0 : index
    %6 = vector.load %arg4[%c0_5, %c0_6] : memref<8x1xf32, #tpu.memory_space<vmem>>, vector<8x1xf32>
    tpu.vector_store %arg4[%c0_5, %c0_6], %5 {strides = array<i32>} : memref<8x1xf32, #tpu.memory_space<vmem>>, vector<8x1xf32>,
    return
  }
  func.func @transform_0(%arg0: i32) -> (i32, i32) {
    %c0_i32 = arith.constant 0 : i32
    %c0_i32_0 = arith.constant 0 : i32
    return %arg0, %c0_i32 : i32, i32
  }
  func.func @transform_1(%arg0: i32) -> (i32, i32) {
    %c0_i32 = arith.constant 0 : i32
    %c0_i32_0 = arith.constant 0 : i32
    %c0_i32_1 = arith.constant 0 : i32
    return %c0_i32, %c0_i32_0 : i32, i32
  }
  func.func @transform_2(%arg0: i32) -> (i32, i32) {
    %c0_i32 = arith.constant 0 : i32
    %c0_i32_0 = arith.constant 0 : i32
    %c0_i32_1 = arith.constant 0 : i32
    return %c0_i32, %c0_i32_0 : i32, i32
  }
  func.func @transform_3(%arg0: i32) -> (i32, i32) {
    %c0_i32 = arith.constant 0 : i32
    %c0_i32_0 = arith.constant 0 : i32
    return %arg0, %c0_i32 : i32, i32
  }
}

</mosaic_0001>

<llo_original>
// kernel: tpu_custom_call.1
$region0: #{tpu_custom_call.1}
  #allocation0 [shape = 'u32[]', space=smem, size = 0x4, offset = 0x4, fixed_abs, tag = 'smem constant byte address 0x4 - core index']
  #allocation1 [shape = 'u32[144,128]{1,0:T(1,128)}', space=vmem, size = 0x12000, scoped, tag = 'internal scratch']
  #allocation2 [shape = 'f32[1,1]{1,0:T(1,128)S(6)}', space=smem, size = 0x200, scoped, tag = 'scoped memory for tpu_custom_call.1']
  %s0 = inlined_call_operand.vmem [shape: bf16[8,768], index: 0, kind: input, shape index: {}]
  %s1 = inlined_call_operand.vmem [shape: bf16[768,1], index: 1, kind: input, shape index: {}]
  %s2 = inlined_call_operand.<no memory space> [shape: f32[1,1], index: 2, kind: input, shape index: {}]
  %s3 = inlined_call_operand.vmem [shape: f32[8,1], index: 3, kind: output, shape index: {}]
  %s4 = sld [smem:[#allocation0]]
  $region22: #{tpu_custom_call.1} parent=0
    _
  %s6 = ssub.s32 1, %s4
  %s7 = scalar_select 0, %s6, %s4
  %8 = sst [smem:[#allocation2]] %s2
  // Predicated region
  $region2: #{tpu_custom_call.1} parent=0 // pred_check
    _
  $region3: #{tpu_custom_call.1} parent=0 // pred_check_branch
    %10 = sbr.rel (0) target = $region5
  $region4: #{tpu_custom_call.1} parent=0 // pred_region
    _
  $region5: #{tpu_custom_call.1} parent=0 // pred_fallthru
    _
  // Predicated region
  $region6: #{tpu_custom_call.1} parent=0 // pred_check
    _
  $region7: #{tpu_custom_call.1} parent=0 // pred_check_branch
    %12 = sbr.rel (0) target = $region9
  $region8: #{tpu_custom_call.1} parent=0 // pred_region
    _
  $region9: #{tpu_custom_call.1} parent=0 // pred_fallthru
    _
  // Predicated region
  $region10: #{tpu_custom_call.1} parent=0 // pred_check
    _
  $region11: #{tpu_custom_call.1} parent=0 // pred_check_branch
    %14 = sbr.rel (0) target = $region13
  $region12: #{tpu_custom_call.1} parent=0 // pred_region
    _
  $region13: #{tpu_custom_call.1} parent=0 // pred_fallthru
    _
  %v16 = vld [vmem:[%s0] sm:$0xff]
  %v17 = vld [vmem:[%s0 + $0x8] sm:$0xff]
  %v18 = vld [vmem:[%s0 + $0x10] sm:$0xff]
  %v19 = vld [vmem:[%s1] sm:$0xf]
  %v20 = vld [vmem:[%s1 + $0x4] sm:$0xf]
  %v21 = vld [vmem:[%s1 + $0x8] sm:$0xf]
  %v22 = vld [vmem:[%s1 + $0xc] sm:$0xf]
  %v23 = vld [vmem:[%s1 + $0x10] sm:$0xf]
  %v24 = vld [vmem:[%s1 + $0x14] sm:$0xf]
  %v25 = vld [vmem:[%s1 + $0x18] sm:$0xf]
  %v26 = vld [vmem:[%s1 + $0x1c] sm:$0xf]
  %v27 = vld [vmem:[%s1 + $0x20] sm:$0xf]
  %v28 = vld [vmem:[%s1 + $0x24] sm:$0xf]
  %v29 = vld [vmem:[%s1 + $0x28] sm:$0xf]
  %v30 = vld [vmem:[%s1 + $0x2c] sm:$0xf]
  %v31 = vld [vmem:[%s1 + $0x30] sm:$0xf]
  %v32 = vld [vmem:[%s1 + $0x34] sm:$0xf]
  %v33 = vld [vmem:[%s1 + $0x38] sm:$0xf]
  %v34 = vld [vmem:[%s1 + $0x3c] sm:$0xf]
  %v35 = vld [vmem:[%s1 + $0x40] sm:$0xf]
  %v36 = vld [vmem:[%s1 + $0x44] sm:$0xf]
  %v37 = vld [vmem:[%s1 + $0x48] sm:$0xf]
  %v38 = vld [vmem:[%s1 + $0x4c] sm:$0xf]
  %v39 = vld [vmem:[%s1 + $0x50] sm:$0xf]
  %v40 = vld [vmem:[%s1 + $0x54] sm:$0xf]
  %v41 = vld [vmem:[%s1 + $0x58] sm:$0xf]
  %v42 = vld [vmem:[%s1 + $0x5c] sm:$0xf]
  %v43 = vld [vmem:[%s1 + $0x60] sm:$0xf]
  %v44 = vld [vmem:[%s1 + $0x64] sm:$0xf]
  %v45 = vld [vmem:[%s1 + $0x68] sm:$0xf]
  %v46 = vld [vmem:[%s1 + $0x6c] sm:$0xf]
  %v47 = vld [vmem:[%s1 + $0x70] sm:$0xf]
  %v48 = vld [vmem:[%s1 + $0x74] sm:$0xf]
  %v49 = vld [vmem:[%s1 + $0x78] sm:$0xf]
  %v50 = vld [vmem:[%s1 + $0x7c] sm:$0xf]
  %v51 = vld [vmem:[%s1 + $0x80] sm:$0xf]
  %v52 = vld [vmem:[%s1 + $0x84] sm:$0xf]
  %v53 = vld [vmem:[%s1 + $0x88] sm:$0xf]
  %v54 = vld [vmem:[%s1 + $0x8c] sm:$0xf]
  %v55 = vld [vmem:[%s1 + $0x90] sm:$0xf]
  %v56 = vld [vmem:[%s1 + $0x94] sm:$0xf]
  %v57 = vld [vmem:[%s1 + $0x98] sm:$0xf]
  %v58 = vld [vmem:[%s1 + $0x9c] sm:$0xf]
  %v59 = vld [vmem:[%s1 + $0xa0] sm:$0xf]
  %v60 = vld [vmem:[%s1 + $0xa4] sm:$0xf]
  %v61 = vld [vmem:[%s1 + $0xa8] sm:$0xf]
  %v62 = vld [vmem:[%s1 + $0xac] sm:$0xf]
  %v63 = vld [vmem:[%s1 + $0xb0] sm:$0xf]
  %v64 = vld [vmem:[%s1 + $0xb4] sm:$0xf]
  %v65 = vld [vmem:[%s1 + $0xb8] sm:$0xf]
  %v66 = vld [vmem:[%s1 + $0xbc] sm:$0xf]
  %v67 = vld [vmem:[%s1 + $0xc0] sm:$0xf]
  %v68 = vld [vmem:[%s1 + $0xc4] sm:$0xf]
  %v69 = vld [vmem:[%s1 + $0xc8] sm:$0xf]
  %v70 = vld [vmem:[%s1 + $0xcc] sm:$0xf]
  %v71 = vld [vmem:[%s1 + $0xd0] sm:$0xf]
  %v72 = vld [vmem:[%s1 + $0xd4] sm:$0xf]
  %v73 = vld [vmem:[%s1 + $0xd8] sm:$0xf]
  %v74 = vld [vmem:[%s1 + $0xdc] sm:$0xf]
  %v75 = vld [vmem:[%s1 + $0xe0] sm:$0xf]
  %v76 = vld [vmem:[%s1 + $0xe4] sm:$0xf]
  %v77 = vld [vmem:[%s1 + $0xe8] sm:$0xf]
  %v78 = vld [vmem:[%s1 + $0xec] sm:$0xf]
  %v79 = vld [vmem:[%s1 + $0xf0] sm:$0xf]
  %v80 = vld [vmem:[%s1 + $0xf4] sm:$0xf]
  %v81 = vld [vmem:[%s1 + $0xf8] sm:$0xf]
  %v82 = vld [vmem:[%s1 + $0xfc] sm:$0xf]
  %v83 = vld [vmem:[%s1 + $0x100] sm:$0xf]
  %v84 = vld [vmem:[%s1 + $0x104] sm:$0xf]
  %v85 = vld [vmem:[%s1 + $0x108] sm:$0xf]
  %v86 = vld [vmem:[%s1 + $0x10c] sm:$0xf]
  %v87 = vld [vmem:[%s1 + $0x110] sm:$0xf]
  %v88 = vld [vmem:[%s1 + $0x114] sm:$0xf]
  %v89 = vld [vmem:[%s1 + $0x118] sm:$0xf]
  %v90 = vld [vmem:[%s1 + $0x11c] sm:$0xf]
  %v91 = vld [vmem:[%s1 + $0x120] sm:$0xf]
  %v92 = vld [vmem:[%s1 + $0x124] sm:$0xf]
  %v93 = vld [vmem:[%s1 + $0x128] sm:$0xf]
  %v94 = vld [vmem:[%s1 + $0x12c] sm:$0xf]
  %v95 = vld [vmem:[%s1 + $0x130] sm:$0xf]
  %v96 = vld [vmem:[%s1 + $0x134] sm:$0xf]
  %v97 = vld [vmem:[%s1 + $0x138] sm:$0xf]
  %v98 = vld [vmem:[%s1 + $0x13c] sm:$0xf]
  %v99 = vld [vmem:[%s1 + $0x140] sm:$0xf]
  %v100 = vld [vmem:[%s1 + $0x144] sm:$0xf]
  %v101 = vld [vmem:[%s1 + $0x148] sm:$0xf]
  %v102 = vld [vmem:[%s1 + $0x14c] sm:$0xf]
  %v103 = vld [vmem:[%s1 + $0x150] sm:$0xf]
  %v104 = vld [vmem:[%s1 + $0x154] sm:$0xf]
  %v105 = vld [vmem:[%s1 + $0x158] sm:$0xf]
  %v106 = vld [vmem:[%s1 + $0x15c] sm:$0xf]
  %v107 = vld [vmem:[%s1 + $0x160] sm:$0xf]
  %v108 = vld [vmem:[%s1 + $0x164] sm:$0xf]
  %v109 = vld [vmem:[%s1 + $0x168] sm:$0xf]
  %v110 = vld [vmem:[%s1 + $0x16c] sm:$0xf]
  %v111 = vld [vmem:[%s1 + $0x170] sm:$0xf]
  %v112 = vld [vmem:[%s1 + $0x174] sm:$0xf]
  %v113 = vld [vmem:[%s1 + $0x178] sm:$0xf]
  %v114 = vld [vmem:[%s1 + $0x17c] sm:$0xf]
  %s115 = sld [smem:[#allocation2]]
  %v116 = vstv %s115
  %v120 = vunpack.c.l.b16 %v16
  %v121 = vunpack.c.h.b16 %v16
  %v122 = vunpack.c.l.b16 %v17
  %v123 = vunpack.c.h.b16 %v17
  %v124 = vunpack.c.l.b16 %v18
  %v125 = vunpack.c.h.b16 %v18
  %v126 = vpack.c.b16 %v120, %v120
  %v127 = vpack.c.b16 %v121, %v121
  %v128 = vpack.c.b16 %v122, %v122
  %v129 = vpack.c.b16 %v123, %v123
  %v130 = vpack.c.b16 %v124, %v124
  %v131 = vpack.c.b16 %v125, %v125
  %v234 = vunpack.c.l.b16 %v19
  %v235 = vunpack.c.l.b16 %v20
  %v236 = vunpack.c.l.b16 %v21
  %v237 = vunpack.c.l.b16 %v22
  %v238 = vunpack.c.l.b16 %v23
  %v239 = vunpack.c.l.b16 %v24
  %v240 = vunpack.c.l.b16 %v25
  %v241 = vunpack.c.l.b16 %v26
  %v242 = vunpack.c.l.b16 %v27
  %v243 = vunpack.c.l.b16 %v28
  %v244 = vunpack.c.l.b16 %v29
  %v245 = vunpack.c.l.b16 %v30
  %v246 = vunpack.c.l.b16 %v31
  %v247 = vunpack.c.l.b16 %v32
  %v248 = vunpack.c.l.b16 %v33
  %v249 = vunpack.c.l.b16 %v34
  %v250 = vunpack.c.l.b16 %v35
  %v251 = vunpack.c.l.b16 %v36
  %v252 = vunpack.c.l.b16 %v37
  %v253 = vunpack.c.l.b16 %v38
  %v254 = vunpack.c.l.b16 %v39
  %v255 = vunpack.c.l.b16 %v40
  %v256 = vunpack.c.l.b16 %v41
  %v257 = vunpack.c.l.b16 %v42
  %v258 = vunpack.c.l.b16 %v43
  %v259 = vunpack.c.l.b16 %v44
  %v260 = vunpack.c.l.b16 %v45
  %v261 = vunpack.c.l.b16 %v46
  %v262 = vunpack.c.l.b16 %v47
  %v263 = vunpack.c.l.b16 %v48
  %v264 = vunpack.c.l.b16 %v49
  %v265 = vunpack.c.l.b16 %v50
  %v266 = vunpack.c.l.b16 %v51
  %v267 = vunpack.c.l.b16 %v52
  %v268 = vunpack.c.l.b16 %v53
  %v269 = vunpack.c.l.b16 %v54
  %v270 = vunpack.c.l.b16 %v55
  %v271 = vunpack.c.l.b16 %v56
  %v272 = vunpack.c.l.b16 %v57
  %v273 = vunpack.c.l.b16 %v58
  %v274 = vunpack.c.l.b16 %v59
  %v275 = vunpack.c.l.b16 %v60
  %v276 = vunpack.c.l.b16 %v61
  %v277 = vunpack.c.l.b16 %v62
  %v278 = vunpack.c.l.b16 %v63
  %v279 = vunpack.c.l.b16 %v64
  %v280 = vunpack.c.l.b16 %v65
  %v281 = vunpack.c.l.b16 %v66
  %v282 = vunpack.c.l.b16 %v67
  %v283 = vunpack.c.l.b16 %v68
  %v284 = vunpack.c.l.b16 %v69
  %v285 = vunpack.c.l.b16 %v70
  %v286 = vunpack.c.l.b16 %v71
  %v287 = vunpack.c.l.b16 %v72
  %v288 = vunpack.c.l.b16 %v73
  %v289 = vunpack.c.l.b16 %v74
  %v290 = vunpack.c.l.b16 %v75
  %v291 = vunpack.c.l.b16 %v76
  %v292 = vunpack.c.l.b16 %v77
  %v293 = vunpack.c.l.b16 %v78
  %v294 = vunpack.c.l.b16 %v79
  %v295 = vunpack.c.l.b16 %v80
  %v296 = vunpack.c.l.b16 %v81
  %v297 = vunpack.c.l.b16 %v82
  %v298 = vunpack.c.l.b16 %v83
  %v299 = vunpack.c.l.b16 %v84
  %v300 = vunpack.c.l.b16 %v85
  %v301 = vunpack.c.l.b16 %v86
  %v302 = vunpack.c.l.b16 %v87
  %v303 = vunpack.c.l.b16 %v88
  %v304 = vunpack.c.l.b16 %v89
  %v305 = vunpack.c.l.b16 %v90
  %v306 = vunpack.c.l.b16 %v91
  %v307 = vunpack.c.l.b16 %v92
  %v308 = vunpack.c.l.b16 %v93
  %v309 = vunpack.c.l.b16 %v94
  %v310 = vunpack.c.l.b16 %v95
  %v311 = vunpack.c.l.b16 %v96
  %v312 = vunpack.c.l.b16 %v97
  %v313 = vunpack.c.l.b16 %v98
  %v314 = vunpack.c.l.b16 %v99
  %v315 = vunpack.c.l.b16 %v100
  %v316 = vunpack.c.l.b16 %v101
  %v317 = vunpack.c.l.b16 %v102
  %v318 = vunpack.c.l.b16 %v103
  %v319 = vunpack.c.l.b16 %v104
  %v320 = vunpack.c.l.b16 %v105
  %v321 = vunpack.c.l.b16 %v106
  %v322 = vunpack.c.l.b16 %v107
  %v323 = vunpack.c.l.b16 %v108
  %v324 = vunpack.c.l.b16 %v109
  %v325 = vunpack.c.l.b16 %v110
  %v326 = vunpack.c.l.b16 %v111
  %v327 = vunpack.c.l.b16 %v112
  %v328 = vunpack.c.l.b16 %v113
  %v329 = vunpack.c.l.b16 %v114
  %v330 = vpack.c.b16 %v235, %v234
  %v331 = vpack.c.b16 %v237, %v236
  %v332 = vpack.c.b16 %v239, %v238
  %v333 = vpack.c.b16 %v241, %v240
  %v334 = vpack.c.b16 %v243, %v242
  %v335 = vpack.c.b16 %v245, %v244
  %v336 = vpack.c.b16 %v247, %v246
  %v337 = vpack.c.b16 %v249, %v248
  %v338 = vpack.c.b16 %v251, %v250
  %v339 = vpack.c.b16 %v253, %v252
  %v340 = vpack.c.b16 %v255, %v254
  %v341 = vpack.c.b16 %v257, %v256
  %v342 = vpack.c.b16 %v259, %v258
  %v343 = vpack.c.b16 %v261, %v260
  %v344 = vpack.c.b16 %v263, %v262
  %v345 = vpack.c.b16 %v265, %v264
  %v346 = vpack.c.b16 %v267, %v266
  %v347 = vpack.c.b16 %v269, %v268
  %v348 = vpack.c.b16 %v271, %v270
  %v349 = vpack.c.b16 %v273, %v272
  %v350 = vpack.c.b16 %v275, %v274
  %v351 = vpack.c.b16 %v277, %v276
  %v352 = vpack.c.b16 %v279, %v278
  %v353 = vpack.c.b16 %v281, %v280
  %v354 = vpack.c.b16 %v283, %v282
  %v355 = vpack.c.b16 %v285, %v284
  %v356 = vpack.c.b16 %v287, %v286
  %v357 = vpack.c.b16 %v289, %v288
  %v358 = vpack.c.b16 %v291, %v290
  %v359 = vpack.c.b16 %v293, %v292
  %v360 = vpack.c.b16 %v295, %v294
  %v361 = vpack.c.b16 %v297, %v296
  %v362 = vpack.c.b16 %v299, %v298
  %v363 = vpack.c.b16 %v301, %v300
  %v364 = vpack.c.b16 %v303, %v302
  %v365 = vpack.c.b16 %v305, %v304
  %v366 = vpack.c.b16 %v307, %v306
  %v367 = vpack.c.b16 %v309, %v308
  %v368 = vpack.c.b16 %v311, %v310
  %v369 = vpack.c.b16 %v313, %v312
  %v370 = vpack.c.b16 %v315, %v314
  %v371 = vpack.c.b16 %v317, %v316
  %v372 = vpack.c.b16 %v319, %v318
  %v373 = vpack.c.b16 %v321, %v320
  %v374 = vpack.c.b16 %v323, %v322
  %v375 = vpack.c.b16 %v325, %v324
  %v376 = vpack.c.b16 %v327, %v326
  %v377 = vpack.c.b16 %v329, %v328
  %426 = vmatprep.subr.bf16.mxu0 0
  %427 = vmatpush1.bf16.msra.mxu0 %v337
  %428 = vmatprep.subr.bf16.mxu0 0
  %429 = vmatpush1.bf16.msra.mxu0 %v336
  %430 = vmatprep.subr.bf16.mxu0 0
  %431 = vmatpush1.bf16.msra.mxu0 %v335
  %432 = vmatprep.subr.bf16.mxu0 0
  %433 = vmatpush1.bf16.msra.mxu0 %v334
  %434 = vmatprep.subr.bf16.mxu0 0
  %435 = vmatpush1.bf16.msra.mxu0 %v333
  %436 = vmatprep.subr.bf16.mxu0 0
  %437 = vmatpush1.bf16.msra.mxu0 %v332
  %438 = vmatprep.subr.bf16.mxu0 0
  %439 = vmatpush1.bf16.msra.mxu0 %v331
  %440 = vmatprep.subr.bf16.mxu0 0
  %441 = vmatpush1.bf16.msra.mxu0 %v330
  %442 = vmatprep.subr.bf16.mxu0 0
  %443 = vmatpush2.bf16.msra.mxu0 %v345
  %444 = vmatprep.subr.bf16.mxu0 0
  %445 = vmatpush2.bf16.msra.mxu0 %v344
  %446 = vmatprep.subr.bf16.mxu0 0
  %447 = vmatpush2.bf16.msra.mxu0 %v343
  %448 = vmatprep.subr.bf16.mxu0 0
  %449 = vmatpush2.bf16.msra.mxu0 %v342
  %450 = vmatprep.subr.bf16.mxu0 0
  %451 = vmatpush2.bf16.msra.mxu0 %v341
  %452 = vmatprep.subr.bf16.mxu0 0
  %453 = vmatpush2.bf16.msra.mxu0 %v340
  %454 = vmatprep.subr.bf16.mxu0 0
  %455 = vmatpush2.bf16.msra.mxu0 %v339
  %456 = vmatprep.subr.bf16.mxu0 0
  %457 = vmatpush2.bf16.msra.mxu0 %v338
  %458 = vmatprep.mubr.bf16.mxu0 %v127
  %459 = vmatmul.mubr.bf16.gmra.mxu0 %v126
  %v460 = vpop.f32.mrf.mxu0
  %v461 = vadd.f32 %v116, %v460
  %v462 = vpop.f32.mrf.mxu0
  %v463 = vpop.f32.mrf.mxu0
  %v464 = vpop.f32.mrf.mxu0
  %465 = vdwg.mxu0
  %466 = vmatprep.subr.bf16.mxu0 0
  %467 = vmatpush1.bf16.msra.mxu0 %v353
  %468 = vmatprep.subr.bf16.mxu0 0
  %469 = vmatpush1.bf16.msra.mxu0 %v352
  %470 = vmatprep.subr.bf16.mxu0 0
  %471 = vmatpush1.bf16.msra.mxu0 %v351
  %472 = vmatprep.subr.bf16.mxu0 0
  %473 = vmatpush1.bf16.msra.mxu0 %v350
  %474 = vmatprep.subr.bf16.mxu0 0
  %475 = vmatpush1.bf16.msra.mxu0 %v349
  %476 = vmatprep.subr.bf16.mxu0 0
  %477 = vmatpush1.bf16.msra.mxu0 %v348
  %478 = vmatprep.subr.bf16.mxu0 0
  %479 = vmatpush1.bf16.msra.mxu0 %v347
  %480 = vmatprep.subr.bf16.mxu0 0
  %481 = vmatpush1.bf16.msra.mxu0 %v346
  %482 = vmatprep.subr.bf16.mxu0 0
  %483 = vmatpush2.bf16.msra.mxu0 %v361
  %484 = vmatprep.subr.bf16.mxu0 0
  %485 = vmatpush2.bf16.msra.mxu0 %v360
  %486 = vmatprep.subr.bf16.mxu0 0
  %487 = vmatpush2.bf16.msra.mxu0 %v359
  %488 = vmatprep.subr.bf16.mxu0 0
  %489 = vmatpush2.bf16.msra.mxu0 %v358
  %490 = vmatprep.subr.bf16.mxu0 0
  %491 = vmatpush2.bf16.msra.mxu0 %v357
  %492 = vmatprep.subr.bf16.mxu0 0
  %493 = vmatpush2.bf16.msra.mxu0 %v356
  %494 = vmatprep.subr.bf16.mxu0 0
  %495 = vmatpush2.bf16.msra.mxu0 %v355
  %496 = vmatprep.subr.bf16.mxu0 0
  %497 = vmatpush2.bf16.msra.mxu0 %v354
  %498 = vmatprep.mubr.bf16.mxu0 %v129
  %499 = vmatmul.mubr.bf16.gmra.mxu0 %v128
  %v500 = vpop.f32.mrf.mxu0
  %v501 = vadd.f32 %v461, %v500
  %v502 = vpop.f32.mrf.mxu0
  %v503 = vpop.f32.mrf.mxu0
  %v504 = vpop.f32.mrf.mxu0
  %505 = vdwg.mxu0
  %506 = vmatprep.subr.bf16.mxu0 0
  %507 = vmatpush1.bf16.msra.mxu0 %v369
  %508 = vmatprep.subr.bf16.mxu0 0
  %509 = vmatpush1.bf16.msra.mxu0 %v368
  %510 = vmatprep.subr.bf16.mxu0 0
  %511 = vmatpush1.bf16.msra.mxu0 %v367
  %512 = vmatprep.subr.bf16.mxu0 0
  %513 = vmatpush1.bf16.msra.mxu0 %v366
  %514 = vmatprep.subr.bf16.mxu0 0
  %515 = vmatpush1.bf16.msra.mxu0 %v365
  %516 = vmatprep.subr.bf16.mxu0 0
  %517 = vmatpush1.bf16.msra.mxu0 %v364
  %518 = vmatprep.subr.bf16.mxu0 0
  %519 = vmatpush1.bf16.msra.mxu0 %v363
  %520 = vmatprep.subr.bf16.mxu0 0
  %521 = vmatpush1.bf16.msra.mxu0 %v362
  %522 = vmatprep.subr.bf16.mxu0 0
  %523 = vmatpush2.bf16.msra.mxu0 %v377
  %524 = vmatprep.subr.bf16.mxu0 0
  %525 = vmatpush2.bf16.msra.mxu0 %v376
  %526 = vmatprep.subr.bf16.mxu0 0
  %527 = vmatpush2.bf16.msra.mxu0 %v375
  %528 = vmatprep.subr.bf16.mxu0 0
  %529 = vmatpush2.bf16.msra.mxu0 %v374
  %530 = vmatprep.subr.bf16.mxu0 0
  %531 = vmatpush2.bf16.msra.mxu0 %v373
  %532 = vmatprep.subr.bf16.mxu0 0
  %533 = vmatpush2.bf16.msra.mxu0 %v372
  %534 = vmatprep.subr.bf16.mxu0 0
  %535 = vmatpush2.bf16.msra.mxu0 %v371
  %536 = vmatprep.subr.bf16.mxu0 0
  %537 = vmatpush2.bf16.msra.mxu0 %v370
  %538 = vmatprep.mubr.bf16.mxu0 %v131
  %539 = vmatmul.mubr.bf16.gmra.mxu0 %v130
  %v540 = vpop.f32.mrf.mxu0
  %v541 = vadd.f32 %v501, %v540
  %v542 = vpop.f32.mrf.mxu0
  %v543 = vpop.f32.mrf.mxu0
  %v544 = vpop.f32.mrf.mxu0
  %545 = vdwg.mxu0
  %vm546 = vcmask 7168
  %547 = vst.msk [vmem:[%s3] sm:$0xff] %vm546, %v541
  // Predicated region
  $region14: #{tpu_custom_call.1} parent=0 // pred_check
    _
  $region15: #{tpu_custom_call.1} parent=0 // pred_check_branch
    %549 = sbr.rel (0) target = $region17
  $region16: #{tpu_custom_call.1} parent=0 // pred_region
    _
  $region17: #{tpu_custom_call.1} parent=0 // pred_fallthru
    _
  // Predicated region
  $region18: #{tpu_custom_call.1} parent=0 // pred_check
    _
  $region19: #{tpu_custom_call.1} parent=0 // pred_check_branch
    %551 = sbr.rel (0) target = $region21
  $region20: #{tpu_custom_call.1} parent=0 // pred_region
    _
  $region21: #{tpu_custom_call.1} parent=0 // pred_fallthru
    _

</llo_original>
